<compile_context>
chip_gen: v7x
topology: tpu7x:2x2x1
jax: 0.10.0
libtpu: 0.0.40
codegen_flags: <defaults>
</compile_context>

<pallas_src>
import functools

import jax
import jax.numpy as jnp
from jax import lax
from jax.experimental import pallas as pl
from jax.experimental.pallas import tpu as pltpu

_LANES = 128


def _se_mlp_and_store(avg, mx, w1_ref, w2_ref, o_ref):
    """y = sigmoid(w2 @ (relu(w1@avg) + relu(w1@mx))); write to o_ref[0]."""
    w1 = w1_ref[...]                                     # (Ch, C), native dtype
    w2 = w2_ref[...]                                     # (C, Ch), native dtype
    # Pack [avg | max] into a (C, 2) RHS without a minor-dim concat.
    col = lax.broadcasted_iota(jnp.int32, (avg.shape[0], 2), 1)
    pooled = jnp.where(col == 0, avg, mx).astype(w1.dtype)          # (C, 2)
    h = jnp.dot(w1, pooled, preferred_element_type=jnp.float32)     # (Ch, 2)
    h = jnp.maximum(h, 0.0)
    h2 = (h[:, 0:1] + h[:, 1:2]).astype(w2.dtype)        # (Ch, 1): conv2 is shared
    y = jnp.dot(w2, h2, preferred_element_type=jnp.float32)         # (C, 1)
    o_ref[0] = jax.nn.sigmoid(y).astype(o_ref.dtype)


def _channel_attention_kernel(x_ref, w1_ref, w2_ref, o_ref, sum_acc, max_acc, *,
                              hw_total, block_hw, needs_mask):
    inv_hw = 1.0 / float(hw_total)

    if block_hw % _LANES != 0:
        # Whole image in one (non-lane-aligned) full-dim block: reduce directly.
        x = x_ref[0]                                                   # (C, HW)
        avg = jnp.sum(x, axis=-1, keepdims=True, dtype=jnp.float32) * inv_hw
        mx = jnp.max(x, axis=-1, keepdims=True).astype(jnp.float32)
        _se_mlp_and_store(avg, mx, w1_ref, w2_ref, o_ref)
        return

    hw = pl.program_id(1)
    n_hw = pl.num_programs(1)
    n_chunks = block_hw // _LANES
    c = sum_acc.shape[0]

    @pl.when(hw == 0)
    def _init():
        sum_acc[...] = jnp.zeros_like(sum_acc)
        max_acc[...] = jnp.full(max_acc.shape, -jnp.inf, dtype=max_acc.dtype)

    if needs_mask:
        remaining = hw_total - hw * block_hw          # valid lanes in this tile
        lane = lax.broadcasted_iota(jnp.int32, (c, _LANES), 1)

    # Reduce this tile into a wide (C, 128) partial with per-chunk VALU ops;
    # the cross-lane XLU reduction happens once, in the finalize step.
    part_sum = None
    part_max = None
    for j in range(n_chunks):
        chunk = x_ref[0, :, j * _LANES:(j + 1) * _LANES].astype(jnp.float32)
        if needs_mask:
            ok = (lane + (j * _LANES)) < remaining
            c_sum = jnp.where(ok, chunk, 0.0)
            c_max = jnp.where(ok, chunk, -jnp.inf)
        else:
            c_sum = chunk
            c_max = chunk
        part_sum = c_sum if part_sum is None else part_sum + c_sum
        part_max = c_max if part_max is None else jnp.maximum(part_max, c_max)

    sum_acc[...] = sum_acc[...] + part_sum
    max_acc[...] = jnp.maximum(max_acc[...], part_max)

    @pl.when(hw == n_hw - 1)
    def _finalize():
        avg = jnp.sum(sum_acc[...], axis=-1, keepdims=True) * inv_hw   # (C, 1)
        mx = jnp.max(max_acc[...], axis=-1, keepdims=True)             # (C, 1)
        _se_mlp_and_store(avg, mx, w1_ref, w2_ref, o_ref)


def _vmem_capacity_bytes():
    try:
        return int(pltpu.get_tpu_info().vmem_capacity_bytes)
    except Exception:
        return 64 * 1024 * 1024        # conservative fallback (v7x has the least VMEM)


def _pick_block_hw(hw_total, c, itemsize, vmem_cap):
    """Largest useful spatial tile for this generation's VMEM."""
    # ~70% of physical VMEM for the double-buffered x tile (v7x ~45 MiB,
    # v5e/v6e ~90 MiB double-buffered), leaving headroom for weights/scratch.
    per_buffer = max((vmem_cap * 7 // 10) // 2, _LANES * c * itemsize)
    max_lanes = (per_buffer // (c * itemsize)) // _LANES * _LANES
    max_lanes = max(_LANES, min(max_lanes, 32768))
    if hw_total <= max_lanes:
        return hw_total                # whole image per grid step (full-dim block)
    # Prefer an exact 128-aligned divisor of HW (no tail masking) if one exists
    # near the budget; otherwise take the largest tile and mask the tail.
    for lanes in range(max_lanes, 0, -_LANES):
        if hw_total % lanes == 0:
            if lanes >= max(512, max_lanes // 2):
                return lanes
            break
    return max_lanes


def channel_attention(x_nchw, w1, w2, *, block_hw=None):
    """CBAM channel attention.

    x_nchw: (B, C, H, W); w1: (C//r, C) = conv1.weight squeezed;
    w2: (C, C//r) = conv2.weight squeezed.  Both convs are bias-free, as in the
    reference module.  Returns (B, C, 1, 1) attention weights.
    """
    B, C, H, W = x_nchw.shape
    Ch = w1.shape[0]
    assert w1.shape == (Ch, C) and w2.shape == (C, Ch), (w1.shape, w2.shape)
    HW = H * W
    itemsize = jnp.dtype(x_nchw.dtype).itemsize

    x_flat = x_nchw.reshape(B, C, HW)   # free relayout: trailing dims merge

    vmem_cap = _vmem_capacity_bytes()
    if block_hw is None:
        block_hw = _pick_block_hw(HW, C, itemsize, vmem_cap)
    assert block_hw == HW or (block_hw % _LANES == 0 and block_hw <= HW), block_hw

    n_hw = pl.cdiv(HW, block_hw)
    needs_mask = (HW % block_hw) != 0

    w_bytes = (w1.size * jnp.dtype(w1.dtype).itemsize
               + w2.size * jnp.dtype(w2.dtype).itemsize)
    vmem_limit = (2 * block_hw * C * itemsize      # double-buffered x tile
                  + 2 * C * _LANES * 4             # wide accumulators
                  + 2 * w_bytes                    # weights
                  + 4 * 1024 * 1024)               # output + headroom
    vmem_limit = int(min(max(vmem_limit, 16 * 1024 * 1024), vmem_cap * 9 // 10))

    cost = pl.CostEstimate(
        flops=2 * B * HW * C + 6 * B * C * Ch,
        transcendentals=B * C,
        bytes_accessed=B * HW * C * itemsize + w_bytes + B * C * itemsize,
    )

    kernel = functools.partial(
        _channel_attention_kernel,
        hw_total=HW, block_hw=block_hw, needs_mask=needs_mask)

    out = pl.pallas_call(
        kernel,
        out_shape=jax.ShapeDtypeStruct((B, C, 1), x_nchw.dtype),
        grid_spec=pltpu.PrefetchScalarGridSpec(
            num_scalar_prefetch=0,
            grid=(B, n_hw),
            in_specs=[
                pl.BlockSpec((1, C, block_hw), lambda b, hw: (b, 0, hw)),
                pl.BlockSpec((Ch, C), lambda b, hw: (0, 0)),
                pl.BlockSpec((C, Ch), lambda b, hw: (0, 0)),
            ],
            out_specs=pl.BlockSpec((1, C, 1), lambda b, hw: (b, 0, 0)),
            scratch_shapes=[
                pltpu.VMEM((C, _LANES), jnp.float32),   # running sum (wide)
                pltpu.VMEM((C, _LANES), jnp.float32),   # running max (wide)
            ],
        ),
        compiler_params=pltpu.CompilerParams(
            dimension_semantics=("parallel", "arbitrary"),
            vmem_limit_bytes=vmem_limit,
        ),
        cost_estimate=cost,
    )(x_flat, w1, w2)

    return out.reshape(B, C, 1, 1)


def channel_attention_ref(x_nchw, w1, w2):
    """Pure-JAX reference mirroring the PyTorch module."""
    xf = x_nchw.astype(jnp.float32)
    avg = jnp.mean(xf, axis=(2, 3))          # (B, C)
    mx = jnp.max(xf, axis=(2, 3))            # (B, C)
    w1f = w1.astype(jnp.float32)
    w2f = w2.astype(jnp.float32)

    def se(v):
        return jnp.maximum(v @ w1f.T, 0.0) @ w2f.T

    out = jax.nn.sigmoid(se(avg) + se(mx))
    return out.astype(x_nchw.dtype)[:, :, None, None]


if __name__ == "__main__":
    B, C, ratio = 2, 64, 16
    Ch = C // ratio  # 4

    key = jax.random.PRNGKey(0)
    kx, k1, k2, kx2 = jax.random.split(key, 4)

    # conv1.weight: (Ch, C, 1, 1) -> (Ch, C); conv2.weight: (C, Ch, 1, 1) -> (C, Ch)
    w1 = jax.random.normal(k1, (Ch, C), dtype=jnp.float32) * (1.0 / jnp.sqrt(C))
    w2 = jax.random.normal(k2, (C, Ch), dtype=jnp.float32) * (1.0 / jnp.sqrt(Ch))

    def check(x, **kw):
        ref = channel_attention_ref(x, w1, w2)
        out = jax.block_until_ready(channel_attention(x, w1, w2, **kw))
        assert out.shape == ref.shape, (out.shape, ref.shape)
        err = float(jnp.max(jnp.abs(out - ref)))
        assert jnp.allclose(out, ref, atol=1e-5, rtol=1e-5), err

    # 16x16 (HW=256): default single full-HW tile, then forced 2-step accumulation.
    x = jax.random.normal(kx, (B, C, 16, 16), dtype=jnp.float32)
    check(x)
    check(x, block_hw=128)

    # 18x18 (HW=324, not a multiple of 128): default full-dim single block, then
    # forced tiled path with masked tail (3 tiles of 128, last has 68 valid lanes).
    x2 = jax.random.normal(kx2, (B, C, 18, 18), dtype=jnp.float32)
    check(x2)
    check(x2, block_hw=128)

    print("KERNEL_OK")
</pallas_src>

<mosaic_0001>
module attributes {stable_mosaic.version = 11 : i64} {
  func.func @_channel_attention_kernel(%arg0: i32, %arg1: i32, %arg2: memref<1x64x256xf32, #tpu.memory_space<vmem>>, %arg3: memref<4x64xf32, #tpu.memory_space<vmem>>, %arg4: memref<64x4xf32, #tpu.memory_space<vmem>>, %arg5: memref<1x64x1xf32, #tpu.memory_space<vmem>>, %arg6: memref<64x128xf32, #tpu.memory_space<vmem>>, %arg7: memref<64x128xf32, #tpu.memory_space<vmem>>) attributes {dimension_semantics = [#tpu.dimension_semantics<parallel>, #tpu.dimension_semantics<arbitrary>], iteration_bounds = array<i64: 2, 1>, scalar_prefetch = 0 : i64, scratch_operands = 2 : i64, tpu.core_type = #tpu.core_type<tc>, window_params = [{transform_indices = @transform_0, window_bounds = array<i64: 1, 64, 256>}, {pipeline_mode = #tpu.pipeline_mode<synchronous>, transform_indices = @transform_1, window_bounds = array<i64: 4, 64>}, {pipeline_mode = #tpu.pipeline_mode<synchronous>, transform_indices = @transform_2, window_bounds = array<i64: 64, 4>}, {transform_indices = @transform_3, window_bounds = array<i64: 1, 64, 1>}]} {
    %c0_i32 = arith.constant 0 : i32
    %0 = arith.cmpi eq, %arg1, %c0_i32 : i32
    %1 = arith.extui %0 : i1 to i32
    %c0_i32_0 = arith.constant 0 : i32
    %2 = arith.cmpi ne, %1, %c0_i32_0 : i32
    scf.if %2 {
      %cst = arith.constant 0.000000e+00 : f32
      %18 = vector.broadcast %cst : f32 to vector<64x128xf32>
      %c0_15 = arith.constant 0 : index
      %c0_16 = arith.constant 0 : index
      %19 = vector.load %arg6[%c0_15, %c0_16] : memref<64x128xf32, #tpu.memory_space<vmem>>, vector<64x128xf32>
      tpu.vector_store %arg6[%c0_15, %c0_16], %18 {strides = array<i32>} : memref<64x128xf32, #tpu.memory_space<vmem>>, vector<64x128xf32>,
      %cst_17 = arith.constant 0xFF800000 : f32
      %20 = vector.broadcast %cst_17 : f32 to vector<64x128xf32>
      %c0_18 = arith.constant 0 : index
      %c0_19 = arith.constant 0 : index
      %21 = vector.load %arg7[%c0_18, %c0_19] : memref<64x128xf32, #tpu.memory_space<vmem>>, vector<64x128xf32>
      tpu.vector_store %arg7[%c0_18, %c0_19], %20 {strides = array<i32>} : memref<64x128xf32, #tpu.memory_space<vmem>>, vector<64x128xf32>,
    } else {
    }
    %c0 = arith.constant 0 : index
    %c0_1 = arith.constant 0 : index
    %c0_2 = arith.constant 0 : index
    %3 = vector.load %arg2[%c0, %c0_1, %c0_2] : memref<1x64x256xf32, #tpu.memory_space<vmem>>, vector<1x64x128xf32>
    %4 = vector.shape_cast %3 : vector<1x64x128xf32> to vector<64x128xf32>
    %c0_3 = arith.constant 0 : index
    %c0_4 = arith.constant 0 : index
    %c128 = arith.constant 128 : index
    %5 = vector.load %arg2[%c0_3, %c0_4, %c128] : memref<1x64x256xf32, #tpu.memory_space<vmem>>, vector<1x64x128xf32>
    %6 = vector.shape_cast %5 : vector<1x64x128xf32> to vector<64x128xf32>
    %7 = arith.addf %4, %6 : vector<64x128xf32>
    %8 = arith.maximumf %4, %6 : vector<64x128xf32>
    %c0_5 = arith.constant 0 : index
    %c0_6 = arith.constant 0 : index
    %9 = vector.load %arg6[%c0_5, %c0_6] : memref<64x128xf32, #tpu.memory_space<vmem>>, vector<64x128xf32>
    %10 = arith.addf %9, %7 : vector<64x128xf32>
    %c0_7 = arith.constant 0 : index
    %c0_8 = arith.constant 0 : index
    %11 = vector.load %arg6[%c0_7, %c0_8] : memref<64x128xf32, #tpu.memory_space<vmem>>, vector<64x128xf32>
    tpu.vector_store %arg6[%c0_7, %c0_8], %10 {strides = array<i32>} : memref<64x128xf32, #tpu.memory_space<vmem>>, vector<64x128xf32>,
    %c0_9 = arith.constant 0 : index
    %c0_10 = arith.constant 0 : index
    %12 = vector.load %arg7[%c0_9, %c0_10] : memref<64x128xf32, #tpu.memory_space<vmem>>, vector<64x128xf32>
    %13 = arith.maximumf %12, %8 : vector<64x128xf32>
    %c0_11 = arith.constant 0 : index
    %c0_12 = arith.constant 0 : index
    %14 = vector.load %arg7[%c0_11, %c0_12] : memref<64x128xf32, #tpu.memory_space<vmem>>, vector<64x128xf32>
    tpu.vector_store %arg7[%c0_11, %c0_12], %13 {strides = array<i32>} : memref<64x128xf32, #tpu.memory_space<vmem>>, vector<64x128xf32>,
    %c0_i32_13 = arith.constant 0 : i32
    %15 = arith.cmpi eq, %arg1, %c0_i32_13 : i32
    %16 = arith.extui %15 : i1 to i32
    %c0_i32_14 = arith.constant 0 : i32
    %17 = arith.cmpi ne, %16, %c0_i32_14 : i32
    scf.if %17 {
      %c0_15 = arith.constant 0 : index
      %c0_16 = arith.constant 0 : index
      %18 = vector.load %arg6[%c0_15, %c0_16] : memref<64x128xf32, #tpu.memory_space<vmem>>, vector<64x128xf32>
      %cst = arith.constant dense<0.000000e+00> : vector<64xf32>
      %19 = vector.multi_reduction <add>, %18, %cst [1] : vector<64x128xf32> to vector<64xf32>
      %20 = vector.shape_cast %19 : vector<64xf32> to vector<64x1xf32>
      %cst_17 = arith.constant 3.906250e-03 : f32
      %21 = vector.broadcast %cst_17 : f32 to vector<64x1xf32>
      %22 = arith.mulf %20, %21 : vector<64x1xf32>
      %c0_18 = arith.constant 0 : index
      %c0_19 = arith.constant 0 : index
      %23 = vector.load %arg7[%c0_18, %c0_19] : memref<64x128xf32, #tpu.memory_space<vmem>>, vector<64x128xf32>
      %cst_20 = arith.constant dense<0xFF800000> : vector<64xf32>
      %24 = vector.multi_reduction <maximumf>, %23, %cst_20 [1] : vector<64x128xf32> to vector<64xf32>
      %25 = vector.shape_cast %24 : vector<64xf32> to vector<64x1xf32>
      %c0_21 = arith.constant 0 : index
      %c0_22 = arith.constant 0 : index
      %26 = vector.load %arg3[%c0_21, %c0_22] : memref<4x64xf32, #tpu.memory_space<vmem>>, vector<4x64xf32>
      %c0_23 = arith.constant 0 : index
      %c0_24 = arith.constant 0 : index
      %27 = vector.load %arg4[%c0_23, %c0_24] : memref<64x4xf32, #tpu.memory_space<vmem>>, vector<64x4xf32>
      %28 = tpu.iota {dimensions = array<i32: 1>} : vector<64x2xi32>
      %c0_i32_25 = arith.constant 0 : i32
      %29 = vector.broadcast %c0_i32_25 : i32 to vector<64x2xi32>
      %30 = arith.cmpi eq, %28, %29 : vector<64x2xi32>
      %31 = vector.shape_cast %22 : vector<64x1xf32> to vector<64x1xf32>
      %32 = vector.broadcast %31 : vector<64x1xf32> to vector<64x2xf32>
      %33 = vector.shape_cast %25 : vector<64x1xf32> to vector<64x1xf32>
      %34 = vector.broadcast %33 : vector<64x1xf32> to vector<64x2xf32>
      %35 = arith.select %30, %32, %34 : vector<64x2xi1>, vector<64x2xf32>
      %cst_26 = arith.constant dense<0.000000e+00> : vector<4x2xf32>
      %36 = tpu.matmul %26, %35, %cst_26 {dimension_numbers = #tpu.dot_dimension_numbers<[1], [0], [0], [1], [0, 0, 1, 1], [], []>} : vector<4x64xf32>, vector<64x2xf32>, vector<4x2xf32> -> vector<4x2xf32>
      %cst_27 = arith.constant 0.000000e+00 : f32
      %37 = vector.broadcast %cst_27 : f32 to vector<4x2xf32>
      %38 = arith.maximumf %36, %37 : vector<4x2xf32>
      %39 = vector.extract_strided_slice %38 {offsets = [0, 0], sizes = [4, 1], strides = [1, 1]} : vector<4x2xf32> to vector<4x1xf32>
      %40 = vector.extract_strided_slice %38 {offsets = [0, 1], sizes = [4, 1], strides = [1, 1]} : vector<4x2xf32> to vector<4x1xf32>
      %41 = arith.addf %39, %40 : vector<4x1xf32>
      %cst_28 = arith.constant dense<0.000000e+00> : vector<64x1xf32>
      %42 = tpu.matmul %27, %41, %cst_28 {dimension_numbers = #tpu.dot_dimension_numbers<[1], [0], [0], [1], [0, 0, 1, 1], [], []>} : vector<64x4xf32>, vector<4x1xf32>, vector<64x1xf32> -> vector<64x1xf32>
      %43 = arith.negf %42 : vector<64x1xf32>
      %44 = math.exp %43 : vector<64x1xf32>
      %cst_29 = arith.constant 1.000000e+00 : f32
      %45 = vector.broadcast %cst_29 : f32 to vector<64x1xf32>
      %46 = arith.addf %45, %44 : vector<64x1xf32>
      %47 = arith.divf %45, %46 : vector<64x1xf32>
      %c0_30 = arith.constant 0 : index
      %c0_31 = arith.constant 0 : index
      %c0_32 = arith.constant 0 : index
      %48 = vector.load %arg5[%c0_30, %c0_31, %c0_32] : memref<1x64x1xf32, #tpu.memory_space<vmem>>, vector<1x64x1xf32>
      %49 = vector.shape_cast %48 : vector<1x64x1xf32> to vector<64x1xf32>
      %50 = vector.shape_cast %47 : vector<64x1xf32> to vector<1x64x1xf32>
      tpu.vector_store %arg5[%c0_30, %c0_31, %c0_32], %50 {strides = array<i32>} : memref<1x64x1xf32, #tpu.memory_space<vmem>>, vector<1x64x1xf32>,
    } else {
    }
    return
  }
  func.func @transform_0(%arg0: i32, %arg1: i32) -> (i32, i32, i32) {
    %c0_i32 = arith.constant 0 : i32
    %c0_i32_0 = arith.constant 0 : i32
    return %arg0, %c0_i32, %arg1 : i32, i32, i32
  }
  func.func @transform_1(%arg0: i32, %arg1: i32) -> (i32, i32) {
    %c0_i32 = arith.constant 0 : i32
    %c0_i32_0 = arith.constant 0 : i32
    %c0_i32_1 = arith.constant 0 : i32
    return %c0_i32, %c0_i32_0 : i32, i32
  }
  func.func @transform_2(%arg0: i32, %arg1: i32) -> (i32, i32) {
    %c0_i32 = arith.constant 0 : i32
    %c0_i32_0 = arith.constant 0 : i32
    %c0_i32_1 = arith.constant 0 : i32
    return %c0_i32, %c0_i32_0 : i32, i32
  }
  func.func @transform_3(%arg0: i32, %arg1: i32) -> (i32, i32, i32) {
    %c0_i32 = arith.constant 0 : i32
    %c0_i32_0 = arith.constant 0 : i32
    %c0_i32_1 = arith.constant 0 : i32
    return %arg0, %c0_i32, %c0_i32_0 : i32, i32, i32
  }
}

</mosaic_0001>

<llo_original>
// kernel: tpu_custom_call.1
$region0: #{tpu_custom_call.1}
  #allocation0 [shape = 'u32[]', space=smem, size = 0x4, offset = 0x4, fixed_abs, tag = 'smem constant byte address 0x4 - core index']
  #allocation1 [shape = 'u32[144,128]{1,0:T(1,128)}', space=vmem, size = 0x12000, scoped, tag = 'internal scratch']
  #allocation2 [shape = 'f32[64,128]{1,0:T(8,128)}', space=vmem, size = 0x8000, scoped, tag = 'scratch operand']
  #allocation3 [shape = 'f32[64,128]{1,0:T(8,128)}', space=vmem, size = 0x8000, scoped, tag = 'scratch operand']
  %s0 = inlined_call_operand.hbm [shape: f32[2,64,256], index: 0, kind: input, shape index: {}]
  %s1 = inlined_call_operand.vmem [shape: f32[4,64], index: 1, kind: input, shape index: {}]
  %s2 = inlined_call_operand.vmem [shape: f32[64,4], index: 2, kind: input, shape index: {}]
  %s3 = inlined_call_operand.vmem [shape: f32[2,64,1], index: 3, kind: output, shape index: {}]
  %s4 = sld [smem:[#allocation0]]
  $region57: #{tpu_custom_call.1} parent=0
    _
  %s6 = ssub.s32 1, %s4
  %s7 = scalar_select 0, %s6, %s4
  $region1: #{tpu_custom_call.1} parent=0
    #allocation4 [shape = 'u8[131072]{0}', space=vmem, size = 0x20000, scoped, tag = 'input window, operand 0']
    #allocation5 [shape = 's32[2]{0}', space=sflag, size = 0x8, scoped, tag = 'scoped memory for tpu_custom_call.1']
    %8 = vsyncpa [#allocation5], 0
    %s9 = scalar_lea.sflag [#allocation5], 1
    %10 = vsyncpa %s9, 0
    loop: start=0, step=1, limit=4
    $region2: #{tpu_custom_call.1} parent=1 // loop_pre_header
      _
    $region3: #{tpu_custom_call.1} parent=1 // loop_header
      %s12 = sphi 0, %s16
      %p13 = scmp.ge.s32.totalorder %s12, 4
      %s19 = sphi 0, %s31
      %s20 = sphi 0, %s27
      %s21 = sphi 0, %s19
      %s22 = sphi 0, %s20
      %s23 = sphi 0, %s21
      %s24 = sphi 0, %s22
      %s36 = sphi 0, %s38
      %s39 = sphi 0, %s36
      %s40 = sphi 0, %s39
      %s56 = sphi 0, %s40
      %s60 = sphi 0, %s60
      %s62 = sphi 0, %s60
      %s63 = sphi 0, %s62
      %s77 = sphi 0, %s63
      %s81 = sphi 0, %s81
      %s83 = sphi 0, %s81
      %s84 = sphi 0, %s83
      %s98 = sphi 0, %s84
      %s104 = sphi 0, %s106
      %s107 = sphi 0, %s104
      %s108 = sphi 0, %s107
      %s124 = sphi 0, %s108
    $region4: #{tpu_custom_call.1} parent=1 // loop_header_branch
      %15 = sbr.rel (%p13) target = $region8
    $region5: #{tpu_custom_call.1} parent=1 // loop_body
      %s17 = ssub.s32 %s12, 1
      %s18 = ssub.s32 %s12, 2
      %s25 = sadd.s32 1, %s20
      %p26 = scmp.ge.s32.totalorder %s25, 1
      %s27 = scalar_select %p26, 0, %s25
      %s28 = sadd.s32 1, %s19
      %s29 = scalar_select %p26, %s28, %s19
      %p30 = scmp.ge.s32.totalorder %s29, 2
      %s31 = scalar_select %p30, 0, %s29
      %s32 = ssub.s32 %s19, %s31
      %s33 = ssub.s32 %s20, %s27
      %s34 = sor.u32 %s32, %s33
      %p35 = scmp.eq.s32.totalorder %s34, 0
      %s37 = sadd.s32 %s36, 1
      %s38 = scalar_select %p35, %s36, %s37
      %p41 = pneg %p35
      %p42 = scmp.eq.s32.totalorder %s12, 1
      %p43 = por %p41, %p42
      %p44 = scmp.ne.s32.totalorder %s36, %s39
      %p45 = scmp.eq.s32.totalorder %s12, 0
      %p46 = por %p44, %p45
      %p47 = scmp.ne.s32.totalorder %s36, %s39
      %p48 = scmp.eq.s32.totalorder %s17, 1
      %p49 = por %p47, %p48
      %p50 = scmp.ne.s32.totalorder %s39, %s40
      %p51 = scmp.eq.s32.totalorder %s17, 0
      %p52 = por %p50, %p51
      %p53 = scmp.ne.s32.totalorder %s39, %s40
      %p54 = scmp.eq.s32.totalorder %s18, 1
      %p55 = por %p53, %p54
      %p57 = scmp.ne.s32.totalorder %s40, %s56
      %p58 = scmp.eq.s32.totalorder %s18, 0
      %p59 = por %p57, %p58
      %s61 = sadd.s32 %s60, 1
      %p64 = scmp.eq.s32.totalorder %s12, 1
      %p65 = scmp.ne.s32.totalorder %s60, %s62
      %p66 = scmp.eq.s32.totalorder %s12, 0
      %p67 = por %p65, %p66
      %p68 = scmp.ne.s32.totalorder %s60, %s62
      %p69 = scmp.eq.s32.totalorder %s17, 1
      %p70 = por %p68, %p69
      %p71 = scmp.ne.s32.totalorder %s62, %s63
      %p72 = scmp.eq.s32.totalorder %s17, 0
      %p73 = por %p71, %p72
      %p74 = scmp.ne.s32.totalorder %s62, %s63
      %p75 = scmp.eq.s32.totalorder %s18, 1
      %p76 = por %p74, %p75
      %p78 = scmp.ne.s32.totalorder %s63, %s77
      %p79 = scmp.eq.s32.totalorder %s18, 0
      %p80 = por %p78, %p79
      %s82 = sadd.s32 %s81, 1
      %p85 = scmp.eq.s32.totalorder %s12, 1
      %p86 = scmp.ne.s32.totalorder %s81, %s83
      %p87 = scmp.eq.s32.totalorder %s12, 0
      %p88 = por %p86, %p87
      %p89 = scmp.ne.s32.totalorder %s81, %s83
      %p90 = scmp.eq.s32.totalorder %s17, 1
      %p91 = por %p89, %p90
      %p92 = scmp.ne.s32.totalorder %s83, %s84
      %p93 = scmp.eq.s32.totalorder %s17, 0
      %p94 = por %p92, %p93
      %p95 = scmp.ne.s32.totalorder %s83, %s84
      %p96 = scmp.eq.s32.totalorder %s18, 1
      %p97 = por %p95, %p96
      %p99 = scmp.ne.s32.totalorder %s84, %s98
      %p100 = scmp.eq.s32.totalorder %s18, 0
      %p101 = por %p99, %p100
      %s102 = ssub.s32 %s19, %s31
      %p103 = scmp.eq.s32.totalorder %s102, 0
      %s105 = sadd.s32 %s104, 1
      %s106 = scalar_select %p103, %s104, %s105
      %p109 = pneg %p103
      %p110 = scmp.eq.s32.totalorder %s12, 1
      %p111 = por %p109, %p110
      %p112 = scmp.ne.s32.totalorder %s104, %s107
      %p113 = scmp.eq.s32.totalorder %s12, 0
      %p114 = por %p112, %p113
      %p115 = scmp.ne.s32.totalorder %s104, %s107
      %p116 = scmp.eq.s32.totalorder %s17, 1
      %p117 = por %p115, %p116
      %p118 = scmp.ne.s32.totalorder %s107, %s108
      %p119 = scmp.eq.s32.totalorder %s17, 0
      %p120 = por %p118, %p119
      %p121 = scmp.ne.s32.totalorder %s107, %s108
      %p122 = scmp.eq.s32.totalorder %s18, 1
      %p123 = por %p121, %p122
      %p125 = scmp.ne.s32.totalorder %s108, %s124
      %p126 = scmp.eq.s32.totalorder %s18, 0
      %p127 = por %p125, %p126
      %p128 = scmp.le.s32.totalorder 1, %s12
      %p129 = scmp.lt.s32.totalorder %s12, 3
      %p130 = pnand %p128, %p129
      %p131 = pneg %p130
      // Predicated region
      $region9: #{tpu_custom_call.1} parent=5 // pred_check
        _
      $region10: #{tpu_custom_call.1} parent=5 // pred_check_branch
        %133 = sbr.rel (%p130) target = $region12
      $region11: #{tpu_custom_call.1} parent=5 // pred_region
        %s134 = ssub.s32 %s12, 1
        // Predicated region
        $region13: #{tpu_custom_call.1} parent=11 // pred_check
          %p135 = pneg %p73
        $region14: #{tpu_custom_call.1} parent=11 // pred_check_branch
          %137 = sbr.rel (%p135) target = $region16
        $region15: #{tpu_custom_call.1} parent=11 // pred_region
          _
        $region16: #{tpu_custom_call.1} parent=11 // pred_fallthru
          _
        // Predicated region
        $region17: #{tpu_custom_call.1} parent=11 // pred_check
          %p138 = pneg %p94
        $region18: #{tpu_custom_call.1} parent=11 // pred_check_branch
          %140 = sbr.rel (%p138) target = $region20
        $region19: #{tpu_custom_call.1} parent=11 // pred_region
          _
        $region20: #{tpu_custom_call.1} parent=11 // pred_fallthru
          _
      $region12: #{tpu_custom_call.1} parent=5 // pred_fallthru
        _
      %p141 = scmp.lt.s32.totalorder %s12, 2
      // Predicated region
      $region21: #{tpu_custom_call.1} parent=5 // pred_check
        %p142 = pneg %p141
      $region22: #{tpu_custom_call.1} parent=5 // pred_check_branch
        %144 = sbr.rel (%p142) target = $region24
      $region23: #{tpu_custom_call.1} parent=5 // pred_region
        // Predicated region
        $region25: #{tpu_custom_call.1} parent=23 // pred_check
          %p145 = pneg %p46
        $region26: #{tpu_custom_call.1} parent=23 // pred_check_branch
          %147 = sbr.rel (%p145) target = $region28
        $region27: #{tpu_custom_call.1} parent=23 // pred_region
          %s148 = sand.u32 %s36, 1
          %s149 = scalar_lea.sflag [#allocation5], %s148
          %s150 = sand.u32 %s36, 1
          %s151 = smul.addr %s150, 128
          %s152 = scalar_lea.vmem [#allocation4], %s151
          %s153 = smul.u32 2, %s20
          %s155 = ssub.s32 2048, 2048
          %156 = vsyncadd %s149, %s155
          %s157 = smul.addr %s19, 16
          %s158 = sadd.s32 %s153, %s157
          %s159 = smul.addr %s158, 128
          %s160 = scalar_lea.hbm %s0, %s159
          %s161 = sshll.u32 %s152, 4
          %s162 = int_to_ptr.vmem [resolvable:$true] %s161
          %167 = dma.hbm_to_vmem [thread:$0]  %s160, 2048, %s162, %s149, 256, 256, 16
        $region28: #{tpu_custom_call.1} parent=23 // pred_fallthru
          _
      $region24: #{tpu_custom_call.1} parent=5 // pred_fallthru
        _
      %p168 = scmp.le.s32.totalorder 1, %s12
      %p169 = scmp.lt.s32.totalorder %s12, 3
      %p170 = pnand %p168, %p169
      %p171 = pneg %p170
      // Predicated region
      $region29: #{tpu_custom_call.1} parent=5 // pred_check
        _
      $region30: #{tpu_custom_call.1} parent=5 // pred_check_branch
        %173 = sbr.rel (%p170) target = $region32
      $region31: #{tpu_custom_call.1} parent=5 // pred_region
        %s174 = ssub.s32 %s12, 1
        %s175 = sand.u32 %s39, 1
        %s176 = scalar_lea.sflag [#allocation5], %s175
        %s177 = sand.u32 %s39, 1
        %s178 = smul.addr %s177, 128
        %s179 = scalar_lea.vmem [#allocation4], %s178
        // Predicated region
        $region33: #{tpu_custom_call.1} parent=31 // pred_check
          %p180 = pneg %p52
        $region34: #{tpu_custom_call.1} parent=31 // pred_check_branch
          %182 = sbr.rel (%p180) target = $region36
        $region35: #{tpu_custom_call.1} parent=31 // pred_region
          %183 = dma.done %s176, 2048
        $region36: #{tpu_custom_call.1} parent=31 // pred_fallthru
          _
        %s184 = sand.u32 %s39, 1
        %s185 = scalar_lea.sflag [#allocation5], %s184
        %s186 = sand.u32 %s39, 1
        %s187 = smul.addr %s186, 128
        %s188 = scalar_lea.vmem [#allocation4], %s187
        %p189 = pneg %p52
        %p190 = pneg %p49
        %p191 = pneg %p73
        %p192 = pneg %p70
        %p193 = pneg %p94
        %p194 = pneg %p91
        %p195 = pneg %p120
        %p196 = pneg %p117
        %p197 = scmp.lt.s32.totalorder %s21, 1
        %s198 = scalar_select %p197, %s21, 1
        %s199 = smul.addr %s198, 8
        %s200 = smul.addr %s199, 8
        %s201 = scalar_lea.vmem %s3, %s200
        %s202 = smul.u32 2, %s22
        %p203 = scmp.lt.s32.totalorder %s21, 1
        %s204 = scalar_select %p203, %s21, 1
        %s205 = smul.addr %s204, 8
        %s206 = smul.addr %s205, 8
        %s207 = scalar_lea.vmem %s3, %s206
        %p208 = scmp.eq.s32.totalorder %s22, 0
        // Predicated region
        $region37: #{tpu_custom_call.1} parent=31 // pred_check
          %p209 = pneg %p208
        $region38: #{tpu_custom_call.1} parent=31 // pred_check_branch
          %211 = sbr.rel (%p209) target = $region40
        $region39: #{tpu_custom_call.1} parent=31 // pred_region
          %212 = vst [vmem:[#allocation2] sm:$0xff] 0.0
          %213 = vst [vmem:[#allocation2 + $0x8] sm:$0xff] 0.0
          %214 = vst [vmem:[#allocation2 + $0x10] sm:$0xff] 0.0
          %215 = vst [vmem:[#allocation2 + $0x18] sm:$0xff] 0.0
          %216 = vst [vmem:[#allocation2 + $0x20] sm:$0xff] 0.0
          %217 = vst [vmem:[#allocation2 + $0x28] sm:$0xff] 0.0
          %218 = vst [vmem:[#allocation2 + $0x30] sm:$0xff] 0.0
          %219 = vst [vmem:[#allocation2 + $0x38] sm:$0xff] 0.0
          %220 = vst [vmem:[#allocation3] sm:$0xff] -inf
          %221 = vst [vmem:[#allocation3 + $0x8] sm:$0xff] -inf
          %222 = vst [vmem:[#allocation3 + $0x10] sm:$0xff] -inf
          %223 = vst [vmem:[#allocation3 + $0x18] sm:$0xff] -inf
          %224 = vst [vmem:[#allocation3 + $0x20] sm:$0xff] -inf
          %225 = vst [vmem:[#allocation3 + $0x28] sm:$0xff] -inf
          %226 = vst [vmem:[#allocation3 + $0x30] sm:$0xff] -inf
          %227 = vst [vmem:[#allocation3 + $0x38] sm:$0xff] -inf
        $region40: #{tpu_custom_call.1} parent=31 // pred_fallthru
          _
        %v228 = vld [vmem:[%s179] sm:$0xff]
        %v229 = vld [vmem:[%s179 + $0x10] sm:$0xff]
        %v230 = vld [vmem:[%s179 + $0x20] sm:$0xff]
        %v231 = vld [vmem:[%s179 + $0x30] sm:$0xff]
        %v232 = vld [vmem:[%s179 + $0x40] sm:$0xff]
        %v233 = vld [vmem:[%s179 + $0x50] sm:$0xff]
        %v234 = vld [vmem:[%s179 + $0x60] sm:$0xff]
        %v235 = vld [vmem:[%s179 + $0x70] sm:$0xff]
        %v236 = vld [vmem:[%s179 + $0x8] sm:$0xff]
        %v237 = vld [vmem:[%s179 + $0x18] sm:$0xff]
        %v238 = vld [vmem:[%s179 + $0x28] sm:$0xff]
        %v239 = vld [vmem:[%s179 + $0x38] sm:$0xff]
        %v240 = vld [vmem:[%s179 + $0x48] sm:$0xff]
        %v241 = vld [vmem:[%s179 + $0x58] sm:$0xff]
        %v242 = vld [vmem:[%s179 + $0x68] sm:$0xff]
        %v243 = vld [vmem:[%s179 + $0x78] sm:$0xff]
        %v244 = vadd.f32 %v228, %v236
        %v245 = vadd.f32 %v229, %v237
        %v246 = vadd.f32 %v230, %v238
        %v247 = vadd.f32 %v231, %v239
        %v248 = vadd.f32 %v232, %v240
        %v249 = vadd.f32 %v233, %v241
        %v250 = vadd.f32 %v234, %v242
        %v251 = vadd.f32 %v235, %v243
        %v252 = vmax.f32 %v228, %v236
        %v253 = vmax.f32 %v229, %v237
        %v254 = vmax.f32 %v230, %v238
        %v255 = vmax.f32 %v231, %v239
        %v256 = vmax.f32 %v232, %v240
        %v257 = vmax.f32 %v233, %v241
        %v258 = vmax.f32 %v234, %v242
        %v259 = vmax.f32 %v235, %v243
        %v260 = vld [vmem:[#allocation2] sm:$0xff]
        %v261 = vld [vmem:[#allocation2 + $0x8] sm:$0xff]
        %v262 = vld [vmem:[#allocation2 + $0x10] sm:$0xff]
        %v263 = vld [vmem:[#allocation2 + $0x18] sm:$0xff]
        %v264 = vld [vmem:[#allocation2 + $0x20] sm:$0xff]
        %v265 = vld [vmem:[#allocation2 + $0x28] sm:$0xff]
        %v266 = vld [vmem:[#allocation2 + $0x30] sm:$0xff]
        %v267 = vld [vmem:[#allocation2 + $0x38] sm:$0xff]
        %v268 = vadd.f32 %v260, %v244
        %v269 = vadd.f32 %v261, %v245
        %v270 = vadd.f32 %v262, %v246
        %v271 = vadd.f32 %v263, %v247
        %v272 = vadd.f32 %v264, %v248
        %v273 = vadd.f32 %v265, %v249
        %v274 = vadd.f32 %v266, %v250
        %v275 = vadd.f32 %v267, %v251
        %276 = vst [vmem:[#allocation2] sm:$0xff] %v268
        %277 = vst [vmem:[#allocation2 + $0x8] sm:$0xff] %v269
        %278 = vst [vmem:[#allocation2 + $0x10] sm:$0xff] %v270
        %279 = vst [vmem:[#allocation2 + $0x18] sm:$0xff] %v271
        %280 = vst [vmem:[#allocation2 + $0x20] sm:$0xff] %v272
        %281 = vst [vmem:[#allocation2 + $0x28] sm:$0xff] %v273
        %282 = vst [vmem:[#allocation2 + $0x30] sm:$0xff] %v274
        %283 = vst [vmem:[#allocation2 + $0x38] sm:$0xff] %v275
        %v284 = vld [vmem:[#allocation3] sm:$0xff]
        %v285 = vld [vmem:[#allocation3 + $0x8] sm:$0xff]
        %v286 = vld [vmem:[#allocation3 + $0x10] sm:$0xff]
        %v287 = vld [vmem:[#allocation3 + $0x18] sm:$0xff]
        %v288 = vld [vmem:[#allocation3 + $0x20] sm:$0xff]
        %v289 = vld [vmem:[#allocation3 + $0x28] sm:$0xff]
        %v290 = vld [vmem:[#allocation3 + $0x30] sm:$0xff]
        %v291 = vld [vmem:[#allocation3 + $0x38] sm:$0xff]
        %v292 = vmax.f32 %v284, %v252
        %v293 = vmax.f32 %v285, %v253
        %v294 = vmax.f32 %v286, %v254
        %v295 = vmax.f32 %v287, %v255
        %v296 = vmax.f32 %v288, %v256
        %v297 = vmax.f32 %v289, %v257
        %v298 = vmax.f32 %v290, %v258
        %v299 = vmax.f32 %v291, %v259
        %300 = vst [vmem:[#allocation3] sm:$0xff] %v292
        %301 = vst [vmem:[#allocation3 + $0x8] sm:$0xff] %v293
        %302 = vst [vmem:[#allocation3 + $0x10] sm:$0xff] %v294
        %303 = vst [vmem:[#allocation3 + $0x18] sm:$0xff] %v295
        %304 = vst [vmem:[#allocation3 + $0x20] sm:$0xff] %v296
        %305 = vst [vmem:[#allocation3 + $0x28] sm:$0xff] %v297
        %306 = vst [vmem:[#allocation3 + $0x30] sm:$0xff] %v298
        %307 = vst [vmem:[#allocation3 + $0x38] sm:$0xff] %v299
        // Predicated region
        $region41: #{tpu_custom_call.1} parent=31 // pred_check
          %p308 = pneg %p208
        $region42: #{tpu_custom_call.1} parent=31 // pred_check_branch
          %310 = sbr.rel (%p308) target = $region44
        $region43: #{tpu_custom_call.1} parent=31 // pred_region
          %v311 = vld [vmem:[#allocation2] sm:$0xff]
          %v312 = vld [vmem:[#allocation2 + $0x8] sm:$0xff]
          %v313 = vld [vmem:[#allocation2 + $0x10] sm:$0xff]
          %v314 = vld [vmem:[#allocation2 + $0x18] sm:$0xff]
          %v315 = vld [vmem:[#allocation2 + $0x20] sm:$0xff]
          %v316 = vld [vmem:[#allocation2 + $0x28] sm:$0xff]
          %v317 = vld [vmem:[#allocation2 + $0x30] sm:$0xff]
          %v318 = vld [vmem:[#allocation2 + $0x38] sm:$0xff]
          %319 = vadd.xlane.f32.xlu0 %v311
          %v320 = vpop.xlane.xlu0 %319
          %321 = vadd.xlane.f32.xlu0 %v312
          %v322 = vpop.xlane.xlu0 %321
          %323 = vadd.xlane.f32.xlu0 %v313
          %v324 = vpop.xlane.xlu0 %323
          %325 = vadd.xlane.f32.xlu0 %v314
          %v326 = vpop.xlane.xlu0 %325
          %327 = vadd.xlane.f32.xlu0 %v315
          %v328 = vpop.xlane.xlu0 %327
          %329 = vadd.xlane.f32.xlu0 %v316
          %v330 = vpop.xlane.xlu0 %329
          %331 = vadd.xlane.f32.xlu0 %v317
          %v332 = vpop.xlane.xlu0 %331
          %333 = vadd.xlane.f32.xlu0 %v318
          %v334 = vpop.xlane.xlu0 %333
          %v335 = vmul.f32 %v320, 0.00390625
          %v336 = vmul.f32 %v322, 0.00390625
          %v337 = vmul.f32 %v324, 0.00390625
          %v338 = vmul.f32 %v326, 0.00390625
          %v339 = vmul.f32 %v328, 0.00390625
          %v340 = vmul.f32 %v330, 0.00390625
          %v341 = vmul.f32 %v332, 0.00390625
          %v342 = vmul.f32 %v334, 0.00390625
          %v343 = vld [vmem:[#allocation3] sm:$0xff]
          %v344 = vld [vmem:[#allocation3 + $0x8] sm:$0xff]
          %v345 = vld [vmem:[#allocation3 + $0x10] sm:$0xff]
          %v346 = vld [vmem:[#allocation3 + $0x18] sm:$0xff]
          %v347 = vld [vmem:[#allocation3 + $0x20] sm:$0xff]
          %v348 = vld [vmem:[#allocation3 + $0x28] sm:$0xff]
          %v349 = vld [vmem:[#allocation3 + $0x30] sm:$0xff]
          %v350 = vld [vmem:[#allocation3 + $0x38] sm:$0xff]
          %351 = vmax.xlane.f32.xlu0 %v343
          %v352 = vpop.xlane.xlu0 %351
          %353 = vmax.xlane.f32.xlu0 %v344
          %v354 = vpop.xlane.xlu0 %353
          %355 = vmax.xlane.f32.xlu0 %v345
          %v356 = vpop.xlane.xlu0 %355
          %357 = vmax.xlane.f32.xlu0 %v346
          %v358 = vpop.xlane.xlu0 %357
          %359 = vmax.xlane.f32.xlu0 %v347
          %v360 = vpop.xlane.xlu0 %359
          %361 = vmax.xlane.f32.xlu0 %v348
          %v362 = vpop.xlane.xlu0 %361
          %363 = vmax.xlane.f32.xlu0 %v349
          %v364 = vpop.xlane.xlu0 %363
          %365 = vmax.xlane.f32.xlu0 %v350
          %v366 = vpop.xlane.xlu0 %365
          %v367 = vld [vmem:[%s1] sm:$0xf]
          %v368 = vld [vmem:[%s2] sm:$0xff]
          %v369 = vld [vmem:[%s2 + $0x8] sm:$0xff]
          %v370 = vld [vmem:[%s2 + $0x10] sm:$0xff]
          %v371 = vld [vmem:[%s2 + $0x18] sm:$0xff]
          %v372 = vld [vmem:[%s2 + $0x20] sm:$0xff]
          %v373 = vld [vmem:[%s2 + $0x28] sm:$0xff]
          %v374 = vld [vmem:[%s2 + $0x30] sm:$0xff]
          %v375 = vld [vmem:[%s2 + $0x38] sm:$0xff]
          %v376 = vlaneseq
          %v377 = vand.u32 %v376, 127
          %vm378 = vcmp.eq.s32.totalorder %v377, 0
          %v379 = vsel %vm378, %v335, %v352
          %v380 = vsel %vm378, %v336, %v354
          %v381 = vsel %vm378, %v337, %v356
          %v382 = vsel %vm378, %v338, %v358
          %v383 = vsel %vm378, %v339, %v360
          %v384 = vsel %vm378, %v340, %v362
          %v385 = vsel %vm378, %v341, %v364
          %v386 = vsel %vm378, %v342, %v366
          %vm387 = vcmask 523264
          %v389 = vsel %vm387, %v367, 0
          %391 = vmatprep.subr.mxu0 0.0
          %392 = vmatpush1.msra.mxu0 %v379
          %393 = vmatprep.subr.mxu0 0.0
          %394 = vmatpush1.msra.mxu0 %v380
          %395 = vmatprep.subr.mxu0 0.0
          %396 = vmatpush1.msra.mxu0 %v381
          %397 = vmatprep.subr.mxu0 0.0
          %398 = vmatpush1.msra.mxu0 %v382
          %399 = vmatprep.subr.mxu0 0.0
          %400 = vmatpush1.msra.mxu0 %v383
          %401 = vmatprep.subr.mxu0 0.0
          %402 = vmatpush1.msra.mxu0 %v384
          %403 = vmatprep.subr.mxu0 0.0
          %404 = vmatpush1.msra.mxu0 %v385
          %405 = vmatprep.subr.mxu0 0.0
          %406 = vmatpush1.msra.mxu0 %v386
          %407 = vmatprep.subr.mxu0 0.0
          %408 = vmatpush1.msra.mxu0 0.0
          %409 = vmatprep.subr.mxu0 0.0
          %410 = vmatpush1.msra.mxu0 0.0
          %411 = vmatprep.subr.mxu0 0.0
          %412 = vmatpush1.msra.mxu0 0.0
          %413 = vmatprep.subr.mxu0 0.0
          %414 = vmatpush1.msra.mxu0 0.0
          %415 = vmatprep.subr.mxu0 0.0
          %416 = vmatpush1.msra.mxu0 0.0
          %417 = vmatprep.subr.mxu0 0.0
          %418 = vmatpush1.msra.mxu0 0.0
          %419 = vmatprep.subr.mxu0 0.0
          %420 = vmatpush1.msra.mxu0 0.0
          %421 = vmatprep.subr.mxu0 0.0
          %422 = vmatpush1.msra.mxu0 0.0
          %423 = vmatprep.subr.mxu0 0.0
          %424 = vmatpush1.msra.mxu0 0.0
          %425 = vmatprep.subr.mxu0 0.0
          %426 = vmatpush1.msra.mxu0 0.0
          %427 = vmatprep.subr.mxu0 0.0
          %428 = vmatpush1.msra.mxu0 0.0
          %429 = vmatprep.subr.mxu0 0.0
          %430 = vmatpush1.msra.mxu0 0.0
          %431 = vmatprep.subr.mxu0 0.0
          %432 = vmatpush1.msra.mxu0 0.0
          %433 = vmatprep.subr.mxu0 0.0
          %434 = vmatpush1.msra.mxu0 0.0
          %435 = vmatprep.subr.mxu0 0.0
          %436 = vmatpush1.msra.mxu0 0.0
          %437 = vmatprep.subr.mxu0 0.0
          %438 = vmatpush1.msra.mxu0 0.0
          %439 = vmatprep.subr.mxu0 0.0
          %440 = vmatpush1.msra.mxu0 0.0
          %441 = vmatprep.subr.mxu0 0.0
          %442 = vmatpush1.msra.mxu0 0.0
          %443 = vmatprep.subr.mxu0 0.0
          %444 = vmatpush1.msra.mxu0 0.0
          %445 = vmatprep.subr.mxu0 0.0
          %446 = vmatpush1.msra.mxu0 0.0
          %447 = vmatprep.subr.mxu0 0.0
          %448 = vmatpush1.msra.mxu0 0.0
          %449 = vmatprep.subr.mxu0 0.0
          %450 = vmatpush1.msra.mxu0 0.0
          %451 = vmatprep.subr.mxu0 0.0
          %452 = vmatpush1.msra.mxu0 0.0
          %453 = vmatprep.subr.mxu0 0.0
          %454 = vmatpush1.msra.mxu0 0.0
          %455 = vmatprep.mubr.f32.mxu0 0.0
          %456 = vmatmul.mubr.f32.gmra.mrb[0].mxu0 %v389
          %v457 = vpop.f32.mrb[0].mxu0
          %v458 = vadd.f32 0.0, %v457
          %v459 = vpop.f32.mrb[0].mxu0
          %460 = vdwg.mxu0
          %v461 = vmax.f32 %v458, 0.0
          %463 = vrot.lane.b32.xlu0 %v461, 127
          %v464 = vpop.permute.xlu0 %463
          %v466 = vadd.f32 %v461, %v464
          %vm467 = vcmask 31744
          %v469 = vsel %vm467, %v368, 0
          %v472 = vsel %vm467, %v369, 0
          %v475 = vsel %vm467, %v370, 0
          %v478 = vsel %vm467, %v371, 0
          %v481 = vsel %vm467, %v372, 0
          %v484 = vsel %vm467, %v373, 0
          %v487 = vsel %vm467, %v374, 0
          %v490 = vsel %vm467, %v375, 0
          %vm492 = vcmask 1043456
          %v494 = vsel %vm492, %v466, 0
          %496 = vmatprep.subr.mxu0 0.0
          %497 = vmatpush1.msra.mxu0 %v494
          %498 = vmatprep.subr.mxu0 0.0
          %499 = vmatpush1.msra.mxu0 0.0
          %500 = vmatprep.subr.mxu0 0.0
          %501 = vmatpush1.msra.mxu0 0.0
          %502 = vmatprep.subr.mxu0 0.0
          %503 = vmatpush1.msra.mxu0 0.0
          %504 = vmatprep.subr.mxu0 0.0
          %505 = vmatpush1.msra.mxu0 0.0
          %506 = vmatprep.subr.mxu0 0.0
          %507 = vmatpush1.msra.mxu0 0.0
          %508 = vmatprep.subr.mxu0 0.0
          %509 = vmatpush1.msra.mxu0 0.0
          %510 = vmatprep.subr.mxu0 0.0
          %511 = vmatpush1.msra.mxu0 0.0
          %512 = vmatprep.subr.mxu0 0.0
          %513 = vmatpush1.msra.mxu0 0.0
          %514 = vmatprep.subr.mxu0 0.0
          %515 = vmatpush1.msra.mxu0 0.0
          %516 = vmatprep.subr.mxu0 0.0
          %517 = vmatpush1.msra.mxu0 0.0
          %518 = vmatprep.subr.mxu0 0.0
          %519 = vmatpush1.msra.mxu0 0.0
          %520 = vmatprep.subr.mxu0 0.0
          %521 = vmatpush1.msra.mxu0 0.0
          %522 = vmatprep.subr.mxu0 0.0
          %523 = vmatpush1.msra.mxu0 0.0
          %524 = vmatprep.subr.mxu0 0.0
          %525 = vmatpush1.msra.mxu0 0.0
          %526 = vmatprep.subr.mxu0 0.0
          %527 = vmatpush1.msra.mxu0 0.0
          %528 = vmatprep.subr.mxu0 0.0
          %529 = vmatpush1.msra.mxu0 0.0
          %530 = vmatprep.subr.mxu0 0.0
          %531 = vmatpush1.msra.mxu0 0.0
          %532 = vmatprep.subr.mxu0 0.0
          %533 = vmatpush1.msra.mxu0 0.0
          %534 = vmatprep.subr.mxu0 0.0
          %535 = vmatpush1.msra.mxu0 0.0
          %536 = vmatprep.subr.mxu0 0.0
          %537 = vmatpush1.msra.mxu0 0.0
          %538 = vmatprep.subr.mxu0 0.0
          %539 = vmatpush1.msra.mxu0 0.0
          %540 = vmatprep.subr.mxu0 0.0
          %541 = vmatpush1.msra.mxu0 0.0
          %542 = vmatprep.subr.mxu0 0.0
          %543 = vmatpush1.msra.mxu0 0.0
          %544 = vmatprep.subr.mxu0 0.0
          %545 = vmatpush1.msra.mxu0 0.0
          %546 = vmatprep.subr.mxu0 0.0
          %547 = vmatpush1.msra.mxu0 0.0
          %548 = vmatprep.subr.mxu0 0.0
          %549 = vmatpush1.msra.mxu0 0.0
          %550 = vmatprep.subr.mxu0 0.0
          %551 = vmatpush1.msra.mxu0 0.0
          %552 = vmatprep.subr.mxu0 0.0
          %553 = vmatpush1.msra.mxu0 0.0
          %554 = vmatprep.subr.mxu0 0.0
          %555 = vmatpush1.msra.mxu0 0.0
          %556 = vmatprep.subr.mxu0 0.0
          %557 = vmatpush1.msra.mxu0 0.0
          %558 = vmatprep.subr.mxu0 0.0
          %559 = vmatpush1.msra.mxu0 0.0
          %560 = vmatprep.mubr.f32.mxu0 0.0
          %561 = vmatmul.mubr.f32.gmra.mrb[0].mxu0 %v469
          %v562 = vpop.f32.mrb[0].mxu0
          %v563 = vadd.f32 0.0, %v562
          %v564 = vpop.f32.mrb[0].mxu0
          %565 = vmatprep.mubr.f32.mxu0 0.0
          %566 = vmatmul.mubr.f32.gmra.mrb[0].mxu0 %v472
          %v567 = vpop.f32.mrb[0].mxu0
          %v568 = vadd.f32 0.0, %v567
          %v569 = vpop.f32.mrb[0].mxu0
          %570 = vmatprep.mubr.f32.mxu0 0.0
          %571 = vmatmul.mubr.f32.gmra.mrb[0].mxu0 %v475
          %v572 = vpop.f32.mrb[0].mxu0
          %v573 = vadd.f32 0.0, %v572
          %v574 = vpop.f32.mrb[0].mxu0
          %575 = vmatprep.mubr.f32.mxu0 0.0
          %576 = vmatmul.mubr.f32.gmra.mrb[0].mxu0 %v478
          %v577 = vpop.f32.mrb[0].mxu0
          %v578 = vadd.f32 0.0, %v577
          %v579 = vpop.f32.mrb[0].mxu0
          %580 = vmatprep.mubr.f32.mxu0 0.0
          %581 = vmatmul.mubr.f32.gmra.mrb[0].mxu0 %v481
          %v582 = vpop.f32.mrb[0].mxu0
          %v583 = vadd.f32 0.0, %v582
          %v584 = vpop.f32.mrb[0].mxu0
          %585 = vmatprep.mubr.f32.mxu0 0.0
          %586 = vmatmul.mubr.f32.gmra.mrb[0].mxu0 %v484
          %v587 = vpop.f32.mrb[0].mxu0
          %v588 = vadd.f32 0.0, %v587
          %v589 = vpop.f32.mrb[0].mxu0
          %590 = vmatprep.mubr.f32.mxu0 0.0
          %591 = vmatmul.mubr.f32.gmra.mrb[0].mxu0 %v487
          %v592 = vpop.f32.mrb[0].mxu0
          %v593 = vadd.f32 0.0, %v592
          %v594 = vpop.f32.mrb[0].mxu0
          %595 = vmatprep.mubr.f32.mxu0 0.0
          %596 = vmatmul.mubr.f32.gmra.mrb[0].mxu0 %v490
          %v597 = vpop.f32.mrb[0].mxu0
          %v598 = vadd.f32 0.0, %v597
          %v599 = vpop.f32.mrb[0].mxu0
          %600 = vdwg.mxu0
          %v601 = vxor.u32 %v563, 2147483648
          %v602 = vxor.u32 %v568, 2147483648
          %v603 = vxor.u32 %v573, 2147483648
          %v604 = vxor.u32 %v578, 2147483648
          %v605 = vxor.u32 %v583, 2147483648
          %v606 = vxor.u32 %v588, 2147483648
          %v607 = vxor.u32 %v593, 2147483648
          %v608 = vxor.u32 %v598, 2147483648
          %v609 = vmul.f32 %v601, 1.442695
          %v610 = vpow.pop %v609
          %v611 = vmul.f32 %v602, 1.442695
          %v612 = vpow.pop %v611
          %v613 = vmul.f32 %v603, 1.442695
          %v614 = vpow.pop %v613
          %v615 = vmul.f32 %v604, 1.442695
          %v616 = vpow.pop %v615
          %v617 = vmul.f32 %v605, 1.442695
          %v618 = vpow.pop %v617
          %v619 = vmul.f32 %v606, 1.442695
          %v620 = vpow.pop %v619
          %v621 = vmul.f32 %v607, 1.442695
          %v622 = vpow.pop %v621
          %v623 = vmul.f32 %v608, 1.442695
          %v624 = vpow.pop %v623
          %v625 = vadd.f32 %v610, 1.0
          %v626 = vadd.f32 %v612, 1.0
          %v627 = vadd.f32 %v614, 1.0
          %v628 = vadd.f32 %v616, 1.0
          %v629 = vadd.f32 %v618, 1.0
          %v630 = vadd.f32 %v620, 1.0
          %v631 = vadd.f32 %v622, 1.0
          %v632 = vadd.f32 %v624, 1.0
          %v633 = vrcp.pop %v625
          %v634 = vmul.f32 1.0, %v633
          %v635 = vrcp.pop %v626
          %v636 = vmul.f32 1.0, %v635
          %v637 = vrcp.pop %v627
          %v638 = vmul.f32 1.0, %v637
          %v639 = vrcp.pop %v628
          %v640 = vmul.f32 1.0, %v639
          %v641 = vrcp.pop %v629
          %v642 = vmul.f32 1.0, %v641
          %v643 = vrcp.pop %v630
          %v644 = vmul.f32 1.0, %v643
          %v645 = vrcp.pop %v631
          %v646 = vmul.f32 1.0, %v645
          %v647 = vrcp.pop %v632
          %v648 = vmul.f32 1.0, %v647
          %vm649 = vcmask 7168
          %650 = vst.msk [vmem:[%s207] sm:$0xff] %vm649, %v634
          %651 = vst.msk [vmem:[%s207 + $0x8] sm:$0xff] %vm649, %v636
          %652 = vst.msk [vmem:[%s207 + $0x10] sm:$0xff] %vm649, %v638
          %653 = vst.msk [vmem:[%s207 + $0x18] sm:$0xff] %vm649, %v640
          %654 = vst.msk [vmem:[%s207 + $0x20] sm:$0xff] %vm649, %v642
          %655 = vst.msk [vmem:[%s207 + $0x28] sm:$0xff] %vm649, %v644
          %656 = vst.msk [vmem:[%s207 + $0x30] sm:$0xff] %vm649, %v646
          %657 = vst.msk [vmem:[%s207 + $0x38] sm:$0xff] %vm649, %v648
        $region44: #{tpu_custom_call.1} parent=31 // pred_fallthru
          _
        %p658 = scmp.lt.s32.totalorder %s21, 1
        %s659 = scalar_select %p658, %s21, 1
        %s660 = smul.addr %s659, 8
        %s661 = smul.addr %s660, 8
        %s662 = scalar_lea.vmem %s3, %s661
        // Predicated region
        $region45: #{tpu_custom_call.1} parent=31 // pred_check
          %p663 = pneg %p117
        $region46: #{tpu_custom_call.1} parent=31 // pred_check_branch
          %665 = sbr.rel (%p663) target = $region48
        $region47: #{tpu_custom_call.1} parent=31 // pred_region
          _
        $region48: #{tpu_custom_call.1} parent=31 // pred_fallthru
          _
      $region32: #{tpu_custom_call.1} parent=5 // pred_fallthru
        _
      %p666 = scmp.le.s32.totalorder 2, %s12
      // Predicated region
      $region49: #{tpu_custom_call.1} parent=5 // pred_check
        %p667 = pneg %p666
      $region50: #{tpu_custom_call.1} parent=5 // pred_check_branch
        %669 = sbr.rel (%p667) target = $region52
      $region51: #{tpu_custom_call.1} parent=5 // pred_region
        %s670 = ssub.s32 %s12, 2
        // Predicated region
        $region53: #{tpu_custom_call.1} parent=51 // pred_check
          %p671 = pneg %p123
        $region54: #{tpu_custom_call.1} parent=51 // pred_check_branch
          %673 = sbr.rel (%p671) target = $region56
        $region55: #{tpu_custom_call.1} parent=51 // pred_region
          %p674 = scmp.lt.s32.totalorder %s23, 1
          %s675 = scalar_select %p674, %s23, 1
          %s676 = smul.addr %s675, 8
          %s677 = smul.addr %s676, 8
          %s678 = scalar_lea.vmem %s3, %s677
        $region56: #{tpu_custom_call.1} parent=51 // pred_fallthru
          _
      $region52: #{tpu_custom_call.1} parent=5 // pred_fallthru
        _
    $region6: #{tpu_custom_call.1} parent=1 // loop_footer
      %s16 = sadd.s32 1, %s12
    $region7: #{tpu_custom_call.1} parent=1 // loop_footer_branch
      %11 = sbr.rel target = $region3
    $region8: #{tpu_custom_call.1} parent=1 // loop_exit
      _
    %679 = vsyncpa [#allocation5], 1
    %s680 = scalar_lea.sflag [#allocation5], 1
    %681 = vsyncpa %s680, 1

</llo_original>
